<compile_context>
chip_gen: v6e
topology: v6e:2x2x1
jax: 0.10.0
libtpu: 0.0.40
codegen_flags: <defaults>
</compile_context>

<pallas_src>
import functools

import jax
import jax.numpy as jnp
from jax.experimental import pallas as pl
from jax.experimental.pallas import tpu as pltpu


def _round_up(x, m):
    return ((x + m - 1) // m) * m


def _vmem_capacity_bytes():
    """Physical VMEM per TensorCore (generation-aware); conservative fallback."""
    try:
        info = pltpu.get_tpu_info()
        cap = getattr(info, "vmem_capacity_bytes", None)
        if cap:
            return int(cap)
    except Exception:
        pass
    return 64 << 20  # v7x per-TC VMEM (smallest current generation)


def _pick_tiles(n, c, itemsize, vmem_cap):
    """Byte-driven (TN, TC) tile sizing against ~60% of physical VMEM."""
    budget = int(0.60 * vmem_cap)

    # Column tile: full C unless C is vocab-scale and cleanly divisible by a
    # multiple-of-128 tile (then the online-logsumexp C-tiled path is used).
    tile_c = c
    if c >= 8192 and c % 128 == 0:
        for cand in (4096, 2048, 1024, 512, 256, 128):
            if c % cand == 0:
                tile_c = cand
                break
    c_tiled = tile_c < c

    per_row = 3 * 2 * tile_c * itemsize        # 3 logit inputs, double-buffered
    per_row += 4 * tile_c * 4                  # f32 in-kernel temporaries
    per_row += 2 * 128 * 4                     # (TN,1) labels, lane padded, x2 bufs
    if c_tiled:
        per_row += 3 * 3 * 128 * 4             # m/l/picked accumulators, lane padded

    tn = budget // max(per_row, 1)
    tn = max(8, (tn // 8) * 8)
    tn = min(tn, _round_up(n, 8))
    return tn, tile_c


def _row_valid(tile_n, n_rows, tile_idx):
    local_row = jax.lax.broadcasted_iota(jnp.int32, (tile_n, 1), 0)
    return (tile_idx * tile_n + local_row) < n_rows


def _write_partial_out(out_ref, s1, s2, s3):
    """Lane-dense (8,128) tile: sublane 0, lanes 0/1/2 carry the 3 CE sums."""
    lane8 = jax.lax.broadcasted_iota(jnp.int32, (8, 128), 1)
    sub8 = jax.lax.broadcasted_iota(jnp.int32, (8, 128), 0)
    row0 = sub8 == 0
    out_ref[...] = jnp.where(row0 & (lane8 == 0), s1,
                     jnp.where(row0 & (lane8 == 1), s2,
                       jnp.where(row0 & (lane8 == 2), s3, 0.0)))


# ---------------------------------------------------------------------------
# Path A: full-C blocking (grid over batch only).  Fused rowmax-cancel form.
# ---------------------------------------------------------------------------
def _loss_kernel_fullc(d1_ref, d2_ref, d3_ref, labels_ref, out_ref, *,
                       n_rows, masked):
    tile_n, tile_c = d1_ref.shape
    labels = labels_ref[...]                                       # (TN, 1) i32

    # Hoisted: one lane iota + one one-hot compare per grid step, shared by
    # all three modalities.
    lane = jax.lax.broadcasted_iota(jnp.int32, (tile_n, tile_c), 1)
    onehot = lane == labels                                        # (TN, TC)

    if masked:
        valid = _row_valid(tile_n, n_rows, pl.program_id(0))       # (TN, 1)

    sums = []
    for d_ref in (d1_ref, d2_ref, d3_ref):
        x = d_ref[...].astype(jnp.float32)                         # (TN, TC)
        m = jnp.max(x, axis=-1, keepdims=True)
        shifted = x - m                                            # reused below
        lse = jnp.log(jnp.sum(jnp.exp(shifted), axis=-1, keepdims=True))
        # rowmax cancels in lse - picked, so use `shifted` for the pick too.
        picked = jnp.sum(jnp.where(onehot, shifted, 0.0), axis=-1, keepdims=True)
        nll = lse - picked                                         # (TN, 1)
        if masked:
            nll = jnp.where(valid, nll, 0.0)
        sums.append(jnp.sum(nll, axis=0, keepdims=True))           # (1, 1)

    _write_partial_out(out_ref, sums[0], sums[1], sums[2])


# ---------------------------------------------------------------------------
# Path B: C-tiled blocking (grid over batch x C), online logsumexp.
# ---------------------------------------------------------------------------
def _loss_kernel_ctiled(d1_ref, d2_ref, d3_ref, labels_ref, out_ref,
                        m_sc, l_sc, p_sc, *, n_rows, masked):
    tile_n, tile_c = d1_ref.shape
    ni = pl.program_id(0)
    ci = pl.program_id(1)

    @pl.when(ci == 0)
    def _():
        m_sc[...] = jnp.full(m_sc.shape, -jnp.inf, m_sc.dtype)
        l_sc[...] = jnp.zeros(l_sc.shape, l_sc.dtype)
        p_sc[...] = jnp.zeros(p_sc.shape, p_sc.dtype)

    labels = labels_ref[...]                                       # (TN, 1) i32
    lane = jax.lax.broadcasted_iota(jnp.int32, (tile_n, tile_c), 1)
    onehot = lane == (labels - ci * tile_c)                        # shared 3x

    for k, d_ref in enumerate((d1_ref, d2_ref, d3_ref)):
        x = d_ref[...].astype(jnp.float32)                         # (TN, TC)
        m_old = m_sc[k]                                            # (TN, 1)
        m_new = jnp.maximum(m_old, jnp.max(x, axis=-1, keepdims=True))
        alpha = jnp.exp(m_old - m_new)
        l_sc[k] = alpha * l_sc[k] + jnp.sum(jnp.exp(x - m_new), axis=-1,
                                            keepdims=True)
        # picked accumulates the *raw* label logit (only one C tile matches).
        p_sc[k] = p_sc[k] + jnp.sum(jnp.where(onehot, x, 0.0), axis=-1,
                                    keepdims=True)
        m_sc[k] = m_new

    @pl.when(ci == pl.num_programs(1) - 1)
    def _():
        if masked:
            valid = _row_valid(tile_n, n_rows, ni)
        sums = []
        for k in range(3):
            nll = (m_sc[k] + jnp.log(l_sc[k])) - p_sc[k]           # (TN, 1)
            if masked:
                nll = jnp.where(valid, nll, 0.0)
            sums.append(jnp.sum(nll, axis=0, keepdims=True))
        _write_partial_out(out_ref, sums[0], sums[1], sums[2])


# ---------------------------------------------------------------------------
# Wrapper
# ---------------------------------------------------------------------------
@functools.partial(jax.jit, static_argnames=("tile_n", "tile_c"))
def multimodal_supervised_loss(data1, data2, data3, labels, deltas,
                               tile_n=None, tile_c=None):
    """data1/2/3: (N, C) float logits (f32 or bf16, passed through unchanged);
    labels: (N,) int; deltas: (3,) float [delta1, delta2, delta3]."""
    n, c = data1.shape
    itemsize = jnp.dtype(data1.dtype).itemsize
    vmem_cap = _vmem_capacity_bytes()

    auto_tn, auto_tc = _pick_tiles(n, c, itemsize, vmem_cap)
    tile_n = auto_tn if tile_n is None else tile_n
    tile_c = auto_tc if tile_c is None else tile_c
    tile_c = min(tile_c, c)
    if tile_c < c and (c % tile_c != 0 or tile_c % 128 != 0):
        tile_c = c  # only tile C when it divides cleanly into 128-multiples

    num_n_tiles = pl.cdiv(n, tile_n)
    num_c_tiles = c // tile_c if tile_c < c else 1
    masked = (n % tile_n) != 0

    labels_col = labels.astype(jnp.int32).reshape(n, 1)
    vmem_limit = min(int(0.75 * vmem_cap), 96 << 20)

    cost = pl.CostEstimate(
        flops=int(3 * 6 * n * c),
        transcendentals=int(3 * n * c),
        bytes_accessed=int(3 * n * c * itemsize + 4 * n * num_c_tiles
                           + num_n_tiles * 8 * 128 * 4),
    )
    out_shape = jax.ShapeDtypeStruct((num_n_tiles * 8, 128), jnp.float32)

    if num_c_tiles == 1:
        partials = pl.pallas_call(
            functools.partial(_loss_kernel_fullc, n_rows=n, masked=masked),
            out_shape=out_shape,
            grid_spec=pltpu.PrefetchScalarGridSpec(
                num_scalar_prefetch=0,
                grid=(num_n_tiles,),
                in_specs=[pl.BlockSpec((tile_n, c), lambda i: (i, 0)),
                          pl.BlockSpec((tile_n, c), lambda i: (i, 0)),
                          pl.BlockSpec((tile_n, c), lambda i: (i, 0)),
                          pl.BlockSpec((tile_n, 1), lambda i: (i, 0))],
                out_specs=pl.BlockSpec((8, 128), lambda i: (i, 0)),
            ),
            compiler_params=pltpu.CompilerParams(
                dimension_semantics=("parallel",),
                vmem_limit_bytes=vmem_limit,
            ),
            cost_estimate=cost,
        )(data1, data2, data3, labels_col)
    else:
        data_spec = pl.BlockSpec((tile_n, tile_c), lambda i, k: (i, k))
        partials = pl.pallas_call(
            functools.partial(_loss_kernel_ctiled, n_rows=n, masked=masked),
            out_shape=out_shape,
            grid_spec=pltpu.PrefetchScalarGridSpec(
                num_scalar_prefetch=0,
                grid=(num_n_tiles, num_c_tiles),
                in_specs=[data_spec, data_spec, data_spec,
                          pl.BlockSpec((tile_n, 1), lambda i, k: (i, 0))],
                out_specs=pl.BlockSpec((8, 128), lambda i, k: (i, 0)),
                scratch_shapes=[pltpu.VMEM((3, tile_n, 1), jnp.float32)] * 3,
            ),
            compiler_params=pltpu.CompilerParams(
                dimension_semantics=("parallel", "arbitrary"),
                vmem_limit_bytes=vmem_limit,
            ),
            cost_estimate=cost,
        )(data1, data2, data3, labels_col)

    # Tiny final combine in plain JAX: sum partial tiles, mean over the true N,
    # weight by delta1/2/3 (matches delta1*l1 + delta2*l2 + delta3*l3).
    sums = jnp.sum(partials, axis=0)                 # (128,)
    per_modality_mean = sums[:3] / n                 # (3,)
    return jnp.dot(deltas.astype(jnp.float32), per_modality_mean)


def _reference_loss(data1, data2, data3, labels, deltas):
    """Plain-JAX reference of the nn.CrossEntropyLoss-based forward."""
    def ce(logits, labels):
        logp = jax.nn.log_softmax(logits.astype(jnp.float32), axis=-1)
        nll = -jnp.take_along_axis(logp, labels[:, None], axis=-1)[:, 0]
        return jnp.mean(nll)
    return deltas[0] * ce(data1, labels) + deltas[1] * ce(data2, labels) \
        + deltas[2] * ce(data3, labels)


if __name__ == "__main__":
    key = jax.random.PRNGKey(0)
    k1, k2, k3, kl = jax.random.split(key, 4)

    # Small classification-head shapes (full-C path).  N deliberately NOT a
    # multiple of the forced tile size so the last tile exercises row masking.
    N, C = 50, 32
    data1 = jax.random.normal(k1, (N, C), dtype=jnp.float32)
    data2 = jax.random.normal(k2, (N, C), dtype=jnp.float32)
    data3 = jax.random.normal(k3, (N, C), dtype=jnp.float32)
    labels = jax.random.randint(kl, (N,), 0, C, dtype=jnp.int32)

    # Module parameters: delta1 = delta2 = delta3 = 1.0 (as in __init__).
    deltas = jnp.array([1.0, 1.0, 1.0], dtype=jnp.float32)

    ref = _reference_loss(data1, data2, data3, labels, deltas)

    # Forced small tile -> 4 grid steps, last tile partially masked.
    out_tiled = multimodal_supervised_loss(data1, data2, data3, labels, deltas,
                                           tile_n=16)
    out_tiled = jax.block_until_ready(out_tiled)
    assert jnp.allclose(out_tiled, ref, atol=1e-5, rtol=1e-5), (out_tiled, ref)

    # Auto (byte-driven) tile-size path (single tile here).
    out_auto = multimodal_supervised_loss(data1, data2, data3, labels, deltas)
    out_auto = jax.block_until_ready(out_auto)
    assert jnp.allclose(out_auto, ref, atol=1e-5, rtol=1e-5), (out_auto, ref)

    # bf16 logits pass through unchanged; kernel upcasts to f32 internally.
    d1b, d2b, d3b = (d.astype(jnp.bfloat16) for d in (data1, data2, data3))
    ref_bf16 = _reference_loss(d1b, d2b, d3b, labels, deltas)
    out_bf16 = multimodal_supervised_loss(d1b, d2b, d3b, labels, deltas,
                                          tile_n=16)
    out_bf16 = jax.block_until_ready(out_bf16)
    assert jnp.allclose(out_bf16, ref_bf16, atol=1e-4, rtol=1e-4), \
        (out_bf16, ref_bf16)

    # C-tiled online-logsumexp path (small stand-in for vocab-scale C):
    # 3 batch tiles (last masked) x 2 C tiles of 128 lanes each.
    N2, C2 = 40, 256
    e1, e2, e3, el = jax.random.split(jax.random.PRNGKey(1), 4)
    f1 = jax.random.normal(e1, (N2, C2), dtype=jnp.float32)
    f2 = jax.random.normal(e2, (N2, C2), dtype=jnp.float32)
    f3 = jax.random.normal(e3, (N2, C2), dtype=jnp.float32)
    lab2 = jax.random.randint(el, (N2,), 0, C2, dtype=jnp.int32)
    ref2 = _reference_loss(f1, f2, f3, lab2, deltas)
    out2 = multimodal_supervised_loss(f1, f2, f3, lab2, deltas,
                                      tile_n=16, tile_c=128)
    out2 = jax.block_until_ready(out2)
    assert jnp.allclose(out2, ref2, atol=1e-5, rtol=1e-5), (out2, ref2)

    print("KERNEL_OK")
</pallas_src>

<mosaic_0001>
module attributes {stable_mosaic.version = 11 : i64} {
  func.func @_loss_kernel_fullc(%arg0: i32, %arg1: memref<16x32xf32, #tpu.memory_space<vmem>>, %arg2: memref<16x32xf32, #tpu.memory_space<vmem>>, %arg3: memref<16x32xf32, #tpu.memory_space<vmem>>, %arg4: memref<16x1xi32, #tpu.memory_space<vmem>>, %arg5: memref<8x128xf32, #tpu.memory_space<vmem>>) attributes {dimension_semantics = [#tpu.dimension_semantics<parallel>], iteration_bounds = array<i64: 4>, scalar_prefetch = 0 : i64, scratch_operands = 0 : i64, tpu.core_type = #tpu.core_type<tc>, window_params = [{transform_indices = @transform_0, window_bounds = array<i64: 16, 32>}, {transform_indices = @transform_1, window_bounds = array<i64: 16, 32>}, {transform_indices = @transform_2, window_bounds = array<i64: 16, 32>}, {transform_indices = @transform_3, window_bounds = array<i64: 16, 1>}, {transform_indices = @transform_4, window_bounds = array<i64: 8, 128>}]} {
    %c0 = arith.constant 0 : index
    %c0_0 = arith.constant 0 : index
    %0 = vector.load %arg4[%c0, %c0_0] : memref<16x1xi32, #tpu.memory_space<vmem>>, vector<16x1xi32>
    %1 = tpu.iota {dimensions = array<i32: 1>} : vector<16x32xi32>
    %2 = vector.broadcast %0 : vector<16x1xi32> to vector<16x32xi32>
    %3 = arith.cmpi eq, %1, %2 : vector<16x32xi32>
    %4 = tpu.iota {dimensions = array<i32: 0>} : vector<16x1xi32>
    %c16_i32 = arith.constant 16 : i32
    %5 = arith.muli %arg0, %c16_i32 : i32
    %6 = vector.broadcast %5 : i32 to vector<16x1xi32>
    %7 = arith.addi %6, %4 : vector<16x1xi32>
    %c50_i32 = arith.constant 50 : i32
    %8 = vector.broadcast %c50_i32 : i32 to vector<16x1xi32>
    %9 = arith.cmpi slt, %7, %8 : vector<16x1xi32>
    %c0_1 = arith.constant 0 : index
    %c0_2 = arith.constant 0 : index
    %10 = vector.load %arg1[%c0_1, %c0_2] : memref<16x32xf32, #tpu.memory_space<vmem>>, vector<16x32xf32>
    %cst = arith.constant dense<0xFF800000> : vector<16xf32>
    %11 = vector.multi_reduction <maximumf>, %10, %cst [1] : vector<16x32xf32> to vector<16xf32>
    %12 = vector.shape_cast %11 : vector<16xf32> to vector<16x1xf32>
    %13 = vector.broadcast %12 : vector<16x1xf32> to vector<16x32xf32>
    %14 = arith.subf %10, %13 : vector<16x32xf32>
    %15 = math.exp %14 : vector<16x32xf32>
    %cst_3 = arith.constant dense<0.000000e+00> : vector<16xf32>
    %16 = vector.multi_reduction <add>, %15, %cst_3 [1] : vector<16x32xf32> to vector<16xf32>
    %17 = vector.shape_cast %16 : vector<16xf32> to vector<16x1xf32>
    %18 = math.log %17 : vector<16x1xf32>
    %cst_4 = arith.constant 0.000000e+00 : f32
    %19 = vector.broadcast %cst_4 : f32 to vector<16x32xf32>
    %20 = arith.select %3, %14, %19 : vector<16x32xi1>, vector<16x32xf32>
    %cst_5 = arith.constant dense<0.000000e+00> : vector<16xf32>
    %21 = vector.multi_reduction <add>, %20, %cst_5 [1] : vector<16x32xf32> to vector<16xf32>
    %22 = vector.shape_cast %21 : vector<16xf32> to vector<16x1xf32>
    %23 = arith.subf %18, %22 : vector<16x1xf32>
    %cst_6 = arith.constant 0.000000e+00 : f32
    %24 = vector.broadcast %cst_6 : f32 to vector<16x1xf32>
    %25 = arith.select %9, %23, %24 : vector<16x1xi1>, vector<16x1xf32>
    %cst_7 = arith.constant dense<0.000000e+00> : vector<1xf32>
    %26 = vector.multi_reduction <add>, %25, %cst_7 [0] : vector<16x1xf32> to vector<1xf32>
    %27 = vector.shape_cast %26 : vector<1xf32> to vector<1x1xf32>
    %c0_8 = arith.constant 0 : index
    %c0_9 = arith.constant 0 : index
    %28 = vector.load %arg2[%c0_8, %c0_9] : memref<16x32xf32, #tpu.memory_space<vmem>>, vector<16x32xf32>
    %cst_10 = arith.constant dense<0xFF800000> : vector<16xf32>
    %29 = vector.multi_reduction <maximumf>, %28, %cst_10 [1] : vector<16x32xf32> to vector<16xf32>
    %30 = vector.shape_cast %29 : vector<16xf32> to vector<16x1xf32>
    %31 = vector.broadcast %30 : vector<16x1xf32> to vector<16x32xf32>
    %32 = arith.subf %28, %31 : vector<16x32xf32>
    %33 = math.exp %32 : vector<16x32xf32>
    %cst_11 = arith.constant dense<0.000000e+00> : vector<16xf32>
    %34 = vector.multi_reduction <add>, %33, %cst_11 [1] : vector<16x32xf32> to vector<16xf32>
    %35 = vector.shape_cast %34 : vector<16xf32> to vector<16x1xf32>
    %36 = math.log %35 : vector<16x1xf32>
    %cst_12 = arith.constant 0.000000e+00 : f32
    %37 = vector.broadcast %cst_12 : f32 to vector<16x32xf32>
    %38 = arith.select %3, %32, %37 : vector<16x32xi1>, vector<16x32xf32>
    %cst_13 = arith.constant dense<0.000000e+00> : vector<16xf32>
    %39 = vector.multi_reduction <add>, %38, %cst_13 [1] : vector<16x32xf32> to vector<16xf32>
    %40 = vector.shape_cast %39 : vector<16xf32> to vector<16x1xf32>
    %41 = arith.subf %36, %40 : vector<16x1xf32>
    %cst_14 = arith.constant 0.000000e+00 : f32
    %42 = vector.broadcast %cst_14 : f32 to vector<16x1xf32>
    %43 = arith.select %9, %41, %42 : vector<16x1xi1>, vector<16x1xf32>
    %cst_15 = arith.constant dense<0.000000e+00> : vector<1xf32>
    %44 = vector.multi_reduction <add>, %43, %cst_15 [0] : vector<16x1xf32> to vector<1xf32>
    %45 = vector.shape_cast %44 : vector<1xf32> to vector<1x1xf32>
    %c0_16 = arith.constant 0 : index
    %c0_17 = arith.constant 0 : index
    %46 = vector.load %arg3[%c0_16, %c0_17] : memref<16x32xf32, #tpu.memory_space<vmem>>, vector<16x32xf32>
    %cst_18 = arith.constant dense<0xFF800000> : vector<16xf32>
    %47 = vector.multi_reduction <maximumf>, %46, %cst_18 [1] : vector<16x32xf32> to vector<16xf32>
    %48 = vector.shape_cast %47 : vector<16xf32> to vector<16x1xf32>
    %49 = vector.broadcast %48 : vector<16x1xf32> to vector<16x32xf32>
    %50 = arith.subf %46, %49 : vector<16x32xf32>
    %51 = math.exp %50 : vector<16x32xf32>
    %cst_19 = arith.constant dense<0.000000e+00> : vector<16xf32>
    %52 = vector.multi_reduction <add>, %51, %cst_19 [1] : vector<16x32xf32> to vector<16xf32>
    %53 = vector.shape_cast %52 : vector<16xf32> to vector<16x1xf32>
    %54 = math.log %53 : vector<16x1xf32>
    %cst_20 = arith.constant 0.000000e+00 : f32
    %55 = vector.broadcast %cst_20 : f32 to vector<16x32xf32>
    %56 = arith.select %3, %50, %55 : vector<16x32xi1>, vector<16x32xf32>
    %cst_21 = arith.constant dense<0.000000e+00> : vector<16xf32>
    %57 = vector.multi_reduction <add>, %56, %cst_21 [1] : vector<16x32xf32> to vector<16xf32>
    %58 = vector.shape_cast %57 : vector<16xf32> to vector<16x1xf32>
    %59 = arith.subf %54, %58 : vector<16x1xf32>
    %cst_22 = arith.constant 0.000000e+00 : f32
    %60 = vector.broadcast %cst_22 : f32 to vector<16x1xf32>
    %61 = arith.select %9, %59, %60 : vector<16x1xi1>, vector<16x1xf32>
    %cst_23 = arith.constant dense<0.000000e+00> : vector<1xf32>
    %62 = vector.multi_reduction <add>, %61, %cst_23 [0] : vector<16x1xf32> to vector<1xf32>
    %63 = vector.shape_cast %62 : vector<1xf32> to vector<1x1xf32>
    %64 = tpu.iota {dimensions = array<i32: 1>} : vector<8x128xi32>
    %65 = tpu.iota {dimensions = array<i32: 0>} : vector<8x128xi32>
    %c0_i32 = arith.constant 0 : i32
    %66 = vector.broadcast %c0_i32 : i32 to vector<8x128xi32>
    %67 = arith.cmpi eq, %65, %66 : vector<8x128xi32>
    %c0_i32_24 = arith.constant 0 : i32
    %68 = vector.broadcast %c0_i32_24 : i32 to vector<8x128xi32>
    %69 = arith.cmpi eq, %64, %68 : vector<8x128xi32>
    %70 = arith.andi %67, %69 : vector<8x128xi1>
    %c1_i32 = arith.constant 1 : i32
    %71 = vector.broadcast %c1_i32 : i32 to vector<8x128xi32>
    %72 = arith.cmpi eq, %64, %71 : vector<8x128xi32>
    %73 = arith.andi %67, %72 : vector<8x128xi1>
    %c2_i32 = arith.constant 2 : i32
    %74 = vector.broadcast %c2_i32 : i32 to vector<8x128xi32>
    %75 = arith.cmpi eq, %64, %74 : vector<8x128xi32>
    %76 = arith.andi %67, %75 : vector<8x128xi1>
    %cst_25 = arith.constant 0.000000e+00 : f32
    %77 = vector.shape_cast %63 : vector<1x1xf32> to vector<1x1xf32>
    %78 = vector.broadcast %77 : vector<1x1xf32> to vector<8x128xf32>
    %79 = vector.broadcast %cst_25 : f32 to vector<8x128xf32>
    %80 = arith.select %76, %78, %79 : vector<8x128xi1>, vector<8x128xf32>
    %81 = vector.shape_cast %45 : vector<1x1xf32> to vector<1x1xf32>
    %82 = vector.broadcast %81 : vector<1x1xf32> to vector<8x128xf32>
    %83 = arith.select %73, %82, %80 : vector<8x128xi1>, vector<8x128xf32>
    %84 = vector.shape_cast %27 : vector<1x1xf32> to vector<1x1xf32>
    %85 = vector.broadcast %84 : vector<1x1xf32> to vector<8x128xf32>
    %86 = arith.select %70, %85, %83 : vector<8x128xi1>, vector<8x128xf32>
    %c0_26 = arith.constant 0 : index
    %c0_27 = arith.constant 0 : index
    %87 = vector.load %arg5[%c0_26, %c0_27] : memref<8x128xf32, #tpu.memory_space<vmem>>, vector<8x128xf32>
    tpu.vector_store %arg5[%c0_26, %c0_27], %86 {strides = array<i32>} : memref<8x128xf32, #tpu.memory_space<vmem>>, vector<8x128xf32>,
    return
  }
  func.func @transform_0(%arg0: i32) -> (i32, i32) {
    %c0_i32 = arith.constant 0 : i32
    %c0_i32_0 = arith.constant 0 : i32
    return %arg0, %c0_i32 : i32, i32
  }
  func.func @transform_1(%arg0: i32) -> (i32, i32) {
    %c0_i32 = arith.constant 0 : i32
    %c0_i32_0 = arith.constant 0 : i32
    return %arg0, %c0_i32 : i32, i32
  }
  func.func @transform_2(%arg0: i32) -> (i32, i32) {
    %c0_i32 = arith.constant 0 : i32
    %c0_i32_0 = arith.constant 0 : i32
    return %arg0, %c0_i32 : i32, i32
  }
  func.func @transform_3(%arg0: i32) -> (i32, i32) {
    %c0_i32 = arith.constant 0 : i32
    %c0_i32_0 = arith.constant 0 : i32
    return %arg0, %c0_i32 : i32, i32
  }
  func.func @transform_4(%arg0: i32) -> (i32, i32) {
    %c0_i32 = arith.constant 0 : i32
    %c0_i32_0 = arith.constant 0 : i32
    return %arg0, %c0_i32 : i32, i32
  }
}

</mosaic_0001>

<llo_original>
// kernel: multimodal_supervised_loss.1
$region0: #{multimodal_supervised_loss.1}
  #allocation0 [shape = 'u32[]', space=smem, size = 0x4, offset = 0x4, fixed_abs, tag = 'smem constant byte address 0x4 - core index']
  #allocation1 [shape = 'u32[144,128]{1,0:T(1,128)}', space=vmem, size = 0x12000, scoped, tag = 'internal scratch']
  %s0 = inlined_call_operand.vmem [shape: f32[50,32], index: 0, kind: input, shape index: {}]
  %s1 = inlined_call_operand.vmem [shape: f32[50,32], index: 1, kind: input, shape index: {}]
  %s2 = inlined_call_operand.vmem [shape: f32[50,32], index: 2, kind: input, shape index: {}]
  %s3 = inlined_call_operand.vmem [shape: s32[50,1], index: 3, kind: input, shape index: {}]
  %s4 = inlined_call_operand.vmem [shape: f32[32,128], index: 4, kind: output, shape index: {}]
  %s5 = sld [smem:[#allocation0]]
  $region49: #{multimodal_supervised_loss.1} parent=0
    _
  %s7 = ssub.s32 1, %s5
  %s8 = scalar_select 0, %s7, %s5
  loop: start=0, step=1, limit=6
  $region2: #{multimodal_supervised_loss.1} parent=0 // loop_pre_header
    _
  $region3: #{multimodal_supervised_loss.1} parent=0 // loop_header
    %s10 = sphi 0, %s14
    %p11 = scmp.ge.s32.totalorder %s10, 6
    %s20 = sphi 0, %s22
    %s23 = sphi 0, %s20
    %s24 = sphi 0, %s23
    %s40 = sphi 0, %s24
    %s46 = sphi 0, %s48
    %s49 = sphi 0, %s46
    %s50 = sphi 0, %s49
    %s66 = sphi 0, %s50
    %s72 = sphi 0, %s74
    %s75 = sphi 0, %s72
    %s76 = sphi 0, %s75
    %s92 = sphi 0, %s76
    %s98 = sphi 0, %s100
    %s101 = sphi 0, %s98
    %s102 = sphi 0, %s101
    %s118 = sphi 0, %s102
    %s124 = sphi 0, %s126
    %s127 = sphi 0, %s124
    %s128 = sphi 0, %s127
    %s144 = sphi 0, %s128
  $region4: #{multimodal_supervised_loss.1} parent=0 // loop_header_branch
    %13 = sbr.rel (%p11) target = $region8
  $region5: #{multimodal_supervised_loss.1} parent=0 // loop_body
    %s15 = ssub.s32 %s10, 1
    %s16 = ssub.s32 %s10, 2
    %s17 = sadd.s32 %s10, 1
    %s18 = ssub.s32 %s10, %s17
    %p19 = scmp.eq.s32.totalorder %s18, 0
    %s21 = sadd.s32 %s20, 1
    %s22 = scalar_select %p19, %s20, %s21
    %p25 = pneg %p19
    %p26 = scmp.eq.s32.totalorder %s10, 3
    %p27 = por %p25, %p26
    %p28 = scmp.ne.s32.totalorder %s20, %s23
    %p29 = scmp.eq.s32.totalorder %s10, 0
    %p30 = por %p28, %p29
    %p31 = scmp.ne.s32.totalorder %s20, %s23
    %p32 = scmp.eq.s32.totalorder %s15, 3
    %p33 = por %p31, %p32
    %p34 = scmp.ne.s32.totalorder %s23, %s24
    %p35 = scmp.eq.s32.totalorder %s15, 0
    %p36 = por %p34, %p35
    %p37 = scmp.ne.s32.totalorder %s23, %s24
    %p38 = scmp.eq.s32.totalorder %s16, 3
    %p39 = por %p37, %p38
    %p41 = scmp.ne.s32.totalorder %s24, %s40
    %p42 = scmp.eq.s32.totalorder %s16, 0
    %p43 = por %p41, %p42
    %s44 = ssub.s32 %s10, %s17
    %p45 = scmp.eq.s32.totalorder %s44, 0
    %s47 = sadd.s32 %s46, 1
    %s48 = scalar_select %p45, %s46, %s47
    %p51 = pneg %p45
    %p52 = scmp.eq.s32.totalorder %s10, 3
    %p53 = por %p51, %p52
    %p54 = scmp.ne.s32.totalorder %s46, %s49
    %p55 = scmp.eq.s32.totalorder %s10, 0
    %p56 = por %p54, %p55
    %p57 = scmp.ne.s32.totalorder %s46, %s49
    %p58 = scmp.eq.s32.totalorder %s15, 3
    %p59 = por %p57, %p58
    %p60 = scmp.ne.s32.totalorder %s49, %s50
    %p61 = scmp.eq.s32.totalorder %s15, 0
    %p62 = por %p60, %p61
    %p63 = scmp.ne.s32.totalorder %s49, %s50
    %p64 = scmp.eq.s32.totalorder %s16, 3
    %p65 = por %p63, %p64
    %p67 = scmp.ne.s32.totalorder %s50, %s66
    %p68 = scmp.eq.s32.totalorder %s16, 0
    %p69 = por %p67, %p68
    %s70 = ssub.s32 %s10, %s17
    %p71 = scmp.eq.s32.totalorder %s70, 0
    %s73 = sadd.s32 %s72, 1
    %s74 = scalar_select %p71, %s72, %s73
    %p77 = pneg %p71
    %p78 = scmp.eq.s32.totalorder %s10, 3
    %p79 = por %p77, %p78
    %p80 = scmp.ne.s32.totalorder %s72, %s75
    %p81 = scmp.eq.s32.totalorder %s10, 0
    %p82 = por %p80, %p81
    %p83 = scmp.ne.s32.totalorder %s72, %s75
    %p84 = scmp.eq.s32.totalorder %s15, 3
    %p85 = por %p83, %p84
    %p86 = scmp.ne.s32.totalorder %s75, %s76
    %p87 = scmp.eq.s32.totalorder %s15, 0
    %p88 = por %p86, %p87
    %p89 = scmp.ne.s32.totalorder %s75, %s76
    %p90 = scmp.eq.s32.totalorder %s16, 3
    %p91 = por %p89, %p90
    %p93 = scmp.ne.s32.totalorder %s76, %s92
    %p94 = scmp.eq.s32.totalorder %s16, 0
    %p95 = por %p93, %p94
    %s96 = ssub.s32 %s10, %s17
    %p97 = scmp.eq.s32.totalorder %s96, 0
    %s99 = sadd.s32 %s98, 1
    %s100 = scalar_select %p97, %s98, %s99
    %p103 = pneg %p97
    %p104 = scmp.eq.s32.totalorder %s10, 3
    %p105 = por %p103, %p104
    %p106 = scmp.ne.s32.totalorder %s98, %s101
    %p107 = scmp.eq.s32.totalorder %s10, 0
    %p108 = por %p106, %p107
    %p109 = scmp.ne.s32.totalorder %s98, %s101
    %p110 = scmp.eq.s32.totalorder %s15, 3
    %p111 = por %p109, %p110
    %p112 = scmp.ne.s32.totalorder %s101, %s102
    %p113 = scmp.eq.s32.totalorder %s15, 0
    %p114 = por %p112, %p113
    %p115 = scmp.ne.s32.totalorder %s101, %s102
    %p116 = scmp.eq.s32.totalorder %s16, 3
    %p117 = por %p115, %p116
    %p119 = scmp.ne.s32.totalorder %s102, %s118
    %p120 = scmp.eq.s32.totalorder %s16, 0
    %p121 = por %p119, %p120
    %s122 = ssub.s32 %s10, %s17
    %p123 = scmp.eq.s32.totalorder %s122, 0
    %s125 = sadd.s32 %s124, 1
    %s126 = scalar_select %p123, %s124, %s125
    %p129 = pneg %p123
    %p130 = scmp.eq.s32.totalorder %s10, 3
    %p131 = por %p129, %p130
    %p132 = scmp.ne.s32.totalorder %s124, %s127
    %p133 = scmp.eq.s32.totalorder %s10, 0
    %p134 = por %p132, %p133
    %p135 = scmp.ne.s32.totalorder %s124, %s127
    %p136 = scmp.eq.s32.totalorder %s15, 3
    %p137 = por %p135, %p136
    %p138 = scmp.ne.s32.totalorder %s127, %s128
    %p139 = scmp.eq.s32.totalorder %s15, 0
    %p140 = por %p138, %p139
    %p141 = scmp.ne.s32.totalorder %s127, %s128
    %p142 = scmp.eq.s32.totalorder %s16, 3
    %p143 = por %p141, %p142
    %p145 = scmp.ne.s32.totalorder %s128, %s144
    %p146 = scmp.eq.s32.totalorder %s16, 0
    %p147 = por %p145, %p146
    %p148 = scmp.le.s32.totalorder 1, %s10
    %p149 = scmp.lt.s32.totalorder %s10, 5
    %p150 = pnand %p148, %p149
    %p151 = pneg %p150
    // Predicated region
    $region9: #{multimodal_supervised_loss.1} parent=5 // pred_check
      _
    $region10: #{multimodal_supervised_loss.1} parent=5 // pred_check_branch
      %153 = sbr.rel (%p150) target = $region12
    $region11: #{multimodal_supervised_loss.1} parent=5 // pred_region
      %s154 = ssub.s32 %s10, 1
    $region12: #{multimodal_supervised_loss.1} parent=5 // pred_fallthru
      _
    %p155 = scmp.lt.s32.totalorder %s10, 4
    // Predicated region
    $region13: #{multimodal_supervised_loss.1} parent=5 // pred_check
      %p156 = pneg %p155
    $region14: #{multimodal_supervised_loss.1} parent=5 // pred_check_branch
      %158 = sbr.rel (%p156) target = $region16
    $region15: #{multimodal_supervised_loss.1} parent=5 // pred_region
      // Predicated region
      $region17: #{multimodal_supervised_loss.1} parent=15 // pred_check
        %p159 = pneg %p30
      $region18: #{multimodal_supervised_loss.1} parent=15 // pred_check_branch
        %161 = sbr.rel (%p159) target = $region20
      $region19: #{multimodal_supervised_loss.1} parent=15 // pred_region
        %s162 = smul.u32 2, %s10
        %s163 = ssub.s32 7, %s162
        %p164 = scmp.lt.s32.totalorder %s163, 2
        %s165 = scalar_select %p164, %s163, 2
        %s166 = smul.u32 128, %s165
        %p167 = scmp.lt.s32.totalorder %s162, 6
        %s168 = scalar_select %p167, %s162, 6
        %s169 = smul.addr %s168, 8
        %s170 = scalar_lea.vmem %s0, %s169
        %s171 = smul.u32 2, %s10
        %s172 = ssub.s32 7, %s171
        %p173 = scmp.lt.s32.totalorder %s172, 2
        %s174 = scalar_select %p173, %s172, 2
        %s175 = smul.u32 128, %s174
      $region20: #{multimodal_supervised_loss.1} parent=15 // pred_fallthru
        _
      // Predicated region
      $region21: #{multimodal_supervised_loss.1} parent=15 // pred_check
        %p176 = pneg %p56
      $region22: #{multimodal_supervised_loss.1} parent=15 // pred_check_branch
        %178 = sbr.rel (%p176) target = $region24
      $region23: #{multimodal_supervised_loss.1} parent=15 // pred_region
        %s179 = smul.u32 2, %s10
        %s180 = ssub.s32 7, %s179
        %p181 = scmp.lt.s32.totalorder %s180, 2
        %s182 = scalar_select %p181, %s180, 2
        %s183 = smul.u32 128, %s182
        %p184 = scmp.lt.s32.totalorder %s179, 6
        %s185 = scalar_select %p184, %s179, 6
        %s186 = smul.addr %s185, 8
        %s187 = scalar_lea.vmem %s1, %s186
        %s188 = smul.u32 2, %s10
        %s189 = ssub.s32 7, %s188
        %p190 = scmp.lt.s32.totalorder %s189, 2
        %s191 = scalar_select %p190, %s189, 2
        %s192 = smul.u32 128, %s191
      $region24: #{multimodal_supervised_loss.1} parent=15 // pred_fallthru
        _
      // Predicated region
      $region25: #{multimodal_supervised_loss.1} parent=15 // pred_check
        %p193 = pneg %p82
      $region26: #{multimodal_supervised_loss.1} parent=15 // pred_check_branch
        %195 = sbr.rel (%p193) target = $region28
      $region27: #{multimodal_supervised_loss.1} parent=15 // pred_region
        %s196 = smul.u32 2, %s10
        %s197 = ssub.s32 7, %s196
        %p198 = scmp.lt.s32.totalorder %s197, 2
        %s199 = scalar_select %p198, %s197, 2
        %s200 = smul.u32 128, %s199
        %p201 = scmp.lt.s32.totalorder %s196, 6
        %s202 = scalar_select %p201, %s196, 6
        %s203 = smul.addr %s202, 8
        %s204 = scalar_lea.vmem %s2, %s203
        %s205 = smul.u32 2, %s10
        %s206 = ssub.s32 7, %s205
        %p207 = scmp.lt.s32.totalorder %s206, 2
        %s208 = scalar_select %p207, %s206, 2
        %s209 = smul.u32 128, %s208
      $region28: #{multimodal_supervised_loss.1} parent=15 // pred_fallthru
        _
      // Predicated region
      $region29: #{multimodal_supervised_loss.1} parent=15 // pred_check
        %p210 = pneg %p108
      $region30: #{multimodal_supervised_loss.1} parent=15 // pred_check_branch
        %212 = sbr.rel (%p210) target = $region32
      $region31: #{multimodal_supervised_loss.1} parent=15 // pred_region
        %s213 = smul.u32 2, %s10
        %s214 = ssub.s32 7, %s213
        %p215 = scmp.lt.s32.totalorder %s214, 2
        %s216 = scalar_select %p215, %s214, 2
        %s217 = smul.u32 128, %s216
        %p218 = scmp.lt.s32.totalorder %s213, 6
        %s219 = scalar_select %p218, %s213, 6
        %s220 = smul.addr %s219, 8
        %s221 = scalar_lea.vmem %s3, %s220
        %s222 = smul.u32 2, %s10
        %s223 = ssub.s32 7, %s222
        %p224 = scmp.lt.s32.totalorder %s223, 2
        %s225 = scalar_select %p224, %s223, 2
        %s226 = smul.u32 128, %s225
      $region32: #{multimodal_supervised_loss.1} parent=15 // pred_fallthru
        _
    $region16: #{multimodal_supervised_loss.1} parent=5 // pred_fallthru
      _
    %p227 = scmp.le.s32.totalorder 1, %s10
    %p228 = scmp.lt.s32.totalorder %s10, 5
    %p229 = pnand %p227, %p228
    %p230 = pneg %p229
    // Predicated region
    $region33: #{multimodal_supervised_loss.1} parent=5 // pred_check
      _
    $region34: #{multimodal_supervised_loss.1} parent=5 // pred_check_branch
      %232 = sbr.rel (%p229) target = $region36
    $region35: #{multimodal_supervised_loss.1} parent=5 // pred_region
      %s233 = ssub.s32 %s10, 1
      %s234 = smul.u32 2, %s15
      %s235 = ssub.s32 7, %s234
      %p236 = scmp.lt.s32.totalorder %s235, 2
      %s237 = scalar_select %p236, %s235, 2
      %s238 = smul.u32 128, %s237
      %p239 = scmp.lt.s32.totalorder %s234, 6
      %s240 = scalar_select %p239, %s234, 6
      %s241 = smul.addr %s240, 8
      %s242 = scalar_lea.vmem %s0, %s241
      %p243 = pneg %p36
      %p244 = pneg %p33
      %s245 = smul.u32 2, %s15
      %s246 = ssub.s32 7, %s245
      %p247 = scmp.lt.s32.totalorder %s246, 2
      %s248 = scalar_select %p247, %s246, 2
      %s249 = smul.u32 128, %s248
      %p250 = scmp.lt.s32.totalorder %s245, 6
      %s251 = scalar_select %p250, %s245, 6
      %s252 = smul.addr %s251, 8
      %s253 = scalar_lea.vmem %s1, %s252
      %p254 = pneg %p62
      %p255 = pneg %p59
      %s256 = smul.u32 2, %s15
      %s257 = ssub.s32 7, %s256
      %p258 = scmp.lt.s32.totalorder %s257, 2
      %s259 = scalar_select %p258, %s257, 2
      %s260 = smul.u32 128, %s259
      %p261 = scmp.lt.s32.totalorder %s256, 6
      %s262 = scalar_select %p261, %s256, 6
      %s263 = smul.addr %s262, 8
      %s264 = scalar_lea.vmem %s2, %s263
      %p265 = pneg %p88
      %p266 = pneg %p85
      %s267 = smul.u32 2, %s15
      %s268 = ssub.s32 7, %s267
      %p269 = scmp.lt.s32.totalorder %s268, 2
      %s270 = scalar_select %p269, %s268, 2
      %s271 = smul.u32 128, %s270
      %p272 = scmp.lt.s32.totalorder %s267, 6
      %s273 = scalar_select %p272, %s267, 6
      %s274 = smul.addr %s273, 8
      %s275 = scalar_lea.vmem %s3, %s274
      %p276 = pneg %p114
      %p277 = pneg %p111
      %p278 = pneg %p140
      %p279 = pneg %p137
      %p280 = scmp.lt.s32.totalorder %s15, 3
      %s281 = scalar_select %p280, %s15, 3
      %s282 = smul.addr %s281, 8
      %s283 = scalar_lea.vmem %s4, %s282
      %s284 = smul.u32 2, %s15
      %s285 = ssub.s32 7, %s284
      %p286 = scmp.lt.s32.totalorder %s285, 2
      %s287 = scalar_select %p286, %s285, 2
      %s288 = smul.u32 128, %s287
      %p289 = scmp.lt.s32.totalorder %s284, 6
      %s290 = scalar_select %p289, %s284, 6
      %s291 = smul.addr %s290, 8
      %s292 = scalar_lea.vmem %s0, %s291
      %s293 = smul.u32 2, %s15
      %s294 = ssub.s32 7, %s293
      %p295 = scmp.lt.s32.totalorder %s294, 2
      %s296 = scalar_select %p295, %s294, 2
      %s297 = smul.u32 128, %s296
      %s298 = smul.u32 2, %s15
      %s299 = ssub.s32 7, %s298
      %p300 = scmp.lt.s32.totalorder %s299, 2
      %s301 = scalar_select %p300, %s299, 2
      %s302 = smul.u32 128, %s301
      %p303 = scmp.lt.s32.totalorder %s298, 6
      %s304 = scalar_select %p303, %s298, 6
      %s305 = smul.addr %s304, 8
      %s306 = scalar_lea.vmem %s1, %s305
      %s307 = smul.u32 2, %s15
      %s308 = ssub.s32 7, %s307
      %p309 = scmp.lt.s32.totalorder %s308, 2
      %s310 = scalar_select %p309, %s308, 2
      %s311 = smul.u32 128, %s310
      %s312 = smul.u32 2, %s15
      %s313 = ssub.s32 7, %s312
      %p314 = scmp.lt.s32.totalorder %s313, 2
      %s315 = scalar_select %p314, %s313, 2
      %s316 = smul.u32 128, %s315
      %p317 = scmp.lt.s32.totalorder %s312, 6
      %s318 = scalar_select %p317, %s312, 6
      %s319 = smul.addr %s318, 8
      %s320 = scalar_lea.vmem %s2, %s319
      %s321 = smul.u32 2, %s15
      %s322 = ssub.s32 7, %s321
      %p323 = scmp.lt.s32.totalorder %s322, 2
      %s324 = scalar_select %p323, %s322, 2
      %s325 = smul.u32 128, %s324
      %s326 = smul.u32 2, %s15
      %s327 = ssub.s32 7, %s326
      %p328 = scmp.lt.s32.totalorder %s327, 2
      %s329 = scalar_select %p328, %s327, 2
      %s330 = smul.u32 128, %s329
      %p331 = scmp.lt.s32.totalorder %s326, 6
      %s332 = scalar_select %p331, %s326, 6
      %s333 = smul.addr %s332, 8
      %s334 = scalar_lea.vmem %s3, %s333
      %s335 = smul.u32 2, %s15
      %s336 = ssub.s32 7, %s335
      %p337 = scmp.lt.s32.totalorder %s336, 2
      %s338 = scalar_select %p337, %s336, 2
      %s339 = smul.u32 128, %s338
      %p340 = scmp.lt.s32.totalorder %s15, 3
      %s341 = scalar_select %p340, %s15, 3
      %s342 = smul.addr %s341, 8
      %s343 = scalar_lea.vmem %s4, %s342
      %v344 = vld [vmem:[%s334] sm:$0xff]
      %v345 = vld [vmem:[%s334 + $0x8] sm:$0xff]
      %v346 = vlaneseq
      %v347 = vand.u32 %v346, 127
      %348 = vset.pattern.permute.xlu0 0
      %349 = vperm.xlu0 %348, %v344
      %v350 = vpop.permute.xlu0 %349
      %351 = vset.pattern.permute.xlu0 0
      %352 = vperm.xlu0 %351, %v345
      %v353 = vpop.permute.xlu0 %352
      %vm354 = vcmp.eq.s32.totalorder %v347, %v350
      %vm355 = vcmp.eq.s32.totalorder %v347, %v353
      %v356 = vlaneseq
      %v357 = vshrl.u32 %v356, 7
      %v358 = vadd.s32 %v357, 8
      %s359 = smul.u32 %s15, 16
      %v360 = vstv %s359
      %v361 = vadd.s32 %v360, %v357
      %v362 = vadd.s32 %v360, %v358
      %vm363 = vcmp.lt.s32.totalorder %v361, 50
      %vm364 = vcmp.lt.s32.totalorder %v362, 50
      %v365 = vld [vmem:[%s292] sm:$0xff]
      %v366 = vld [vmem:[%s292 + $0x8] sm:$0xff]
      %vm367 = vcmask 261120
      %v368 = vsel %vm367, %v365, -inf
      %369 = vmax.xlane.f32.xlu0 %v368
      %v370 = vpop.xlane.xlu0 %369
      %v371 = vsel %vm367, %v366, -inf
      %372 = vmax.xlane.f32.xlu0 %v371
      %v373 = vpop.xlane.xlu0 %372
      %v374 = vsub.f32 %v365, %v370
      %v375 = vsub.f32 %v366, %v373
      %v376 = vmul.f32 %v374, 1.442695
      %v377 = vpow.pop %v376
      %v378 = vmul.f32 %v375, 1.442695
      %v379 = vpow.pop %v378
      %v380 = vsel %vm367, %v377, 0.0
      %381 = vadd.xlane.f32.xlu0 %v380
      %v382 = vpop.xlane.xlu0 %381
      %v383 = vsel %vm367, %v379, 0.0
      %384 = vadd.xlane.f32.xlu0 %v383
      %v385 = vpop.xlane.xlu0 %384
      %v386 = vlog2.pop %v382
      %v387 = vmul.f32 %v386, 0.6931472
      %v388 = vlog2.pop %v385
      %v389 = vmul.f32 %v388, 0.6931472
      %v390 = vsel %vm354, %v374, 0.0
      %v391 = vsel %vm355, %v375, 0.0
      %v392 = vsel %vm367, %v390, 0.0
      %393 = vadd.xlane.f32.xlu0 %v392
      %v394 = vpop.xlane.xlu0 %393
      %v395 = vsel %vm367, %v391, 0.0
      %396 = vadd.xlane.f32.xlu0 %v395
      %v397 = vpop.xlane.xlu0 %396
      %v398 = vsub.f32 %v387, %v394
      %v399 = vsub.f32 %v389, %v397
      %v400 = vsel %vm363, %v398, 0.0
      %v401 = vsel %vm364, %v399, 0.0
      %v402 = vadd.f32 %v400, %v401
      %v403 = vrot.slane %v402, 4
      %v404 = vadd.f32 %v402, %v403
      %v405 = vrot.slane %v404, 2
      %v406 = vadd.f32 %v404, %v405
      %v407 = vrot.slane %v406, 1
      %v408 = vadd.f32 %v406, %v407
      %v409 = vld [vmem:[%s306] sm:$0xff]
      %v410 = vld [vmem:[%s306 + $0x8] sm:$0xff]
      %v411 = vsel %vm367, %v409, -inf
      %412 = vmax.xlane.f32.xlu0 %v411
      %v413 = vpop.xlane.xlu0 %412
      %v414 = vsel %vm367, %v410, -inf
      %415 = vmax.xlane.f32.xlu0 %v414
      %v416 = vpop.xlane.xlu0 %415
      %v417 = vsub.f32 %v409, %v413
      %v418 = vsub.f32 %v410, %v416
      %v419 = vmul.f32 %v417, 1.442695
      %v420 = vpow.pop %v419
      %v421 = vmul.f32 %v418, 1.442695
      %v422 = vpow.pop %v421
      %v423 = vsel %vm367, %v420, 0.0
      %424 = vadd.xlane.f32.xlu0 %v423
      %v425 = vpop.xlane.xlu0 %424
      %v426 = vsel %vm367, %v422, 0.0
      %427 = vadd.xlane.f32.xlu0 %v426
      %v428 = vpop.xlane.xlu0 %427
      %v429 = vlog2.pop %v425
      %v430 = vmul.f32 %v429, 0.6931472
      %v431 = vlog2.pop %v428
      %v432 = vmul.f32 %v431, 0.6931472
      %v433 = vsel %vm354, %v417, 0.0
      %v434 = vsel %vm355, %v418, 0.0
      %v435 = vsel %vm367, %v433, 0.0
      %436 = vadd.xlane.f32.xlu0 %v435
      %v437 = vpop.xlane.xlu0 %436
      %v438 = vsel %vm367, %v434, 0.0
      %439 = vadd.xlane.f32.xlu0 %v438
      %v440 = vpop.xlane.xlu0 %439
      %v441 = vsub.f32 %v430, %v437
      %v442 = vsub.f32 %v432, %v440
      %v443 = vsel %vm363, %v441, 0.0
      %v444 = vsel %vm364, %v442, 0.0
      %v445 = vadd.f32 %v443, %v444
      %v446 = vrot.slane %v445, 4
      %v447 = vadd.f32 %v445, %v446
      %v448 = vrot.slane %v447, 2
      %v449 = vadd.f32 %v447, %v448
      %v450 = vrot.slane %v449, 1
      %v451 = vadd.f32 %v449, %v450
      %v452 = vld [vmem:[%s320] sm:$0xff]
      %v453 = vld [vmem:[%s320 + $0x8] sm:$0xff]
      %v454 = vsel %vm367, %v452, -inf
      %455 = vmax.xlane.f32.xlu0 %v454
      %v456 = vpop.xlane.xlu0 %455
      %v457 = vsel %vm367, %v453, -inf
      %458 = vmax.xlane.f32.xlu0 %v457
      %v459 = vpop.xlane.xlu0 %458
      %v460 = vsub.f32 %v452, %v456
      %v461 = vsub.f32 %v453, %v459
      %v462 = vmul.f32 %v460, 1.442695
      %v463 = vpow.pop %v462
      %v464 = vmul.f32 %v461, 1.442695
      %v465 = vpow.pop %v464
      %v466 = vsel %vm367, %v463, 0.0
      %467 = vadd.xlane.f32.xlu0 %v466
      %v468 = vpop.xlane.xlu0 %467
      %v469 = vsel %vm367, %v465, 0.0
      %470 = vadd.xlane.f32.xlu0 %v469
      %v471 = vpop.xlane.xlu0 %470
      %v472 = vlog2.pop %v468
      %v473 = vmul.f32 %v472, 0.6931472
      %v474 = vlog2.pop %v471
      %v475 = vmul.f32 %v474, 0.6931472
      %v476 = vsel %vm354, %v460, 0.0
      %v477 = vsel %vm355, %v461, 0.0
      %v478 = vsel %vm367, %v476, 0.0
      %479 = vadd.xlane.f32.xlu0 %v478
      %v480 = vpop.xlane.xlu0 %479
      %v481 = vsel %vm367, %v477, 0.0
      %482 = vadd.xlane.f32.xlu0 %v481
      %v483 = vpop.xlane.xlu0 %482
      %v484 = vsub.f32 %v473, %v480
      %v485 = vsub.f32 %v475, %v483
      %v486 = vsel %vm363, %v484, 0.0
      %v487 = vsel %vm364, %v485, 0.0
      %v488 = vadd.f32 %v486, %v487
      %v489 = vrot.slane %v488, 4
      %v490 = vadd.f32 %v488, %v489
      %v491 = vrot.slane %v490, 2
      %v492 = vadd.f32 %v490, %v491
      %v493 = vrot.slane %v492, 1
      %v494 = vadd.f32 %v492, %v493
      %vm495 = vcmp.eq.s32.totalorder %v357, 0
      %vm496 = vcmp.eq.s32.totalorder %v347, 0
      %vm497 = vmand %vm495, %vm496
      %vm498 = vcmp.eq.s32.totalorder %v347, 1
      %vm499 = vmand %vm495, %vm498
      %vm500 = vcmp.eq.s32.totalorder %v347, 2
      %vm501 = vmand %vm495, %vm500
      %v502 = vsel %vm501, %v494, 0.0
      %v503 = vsel %vm499, %v451, %v502
      %v504 = vsel %vm497, %v408, %v503
      %505 = vst [vmem:[%s343] sm:$0xff] %v504
      %p506 = scmp.lt.s32.totalorder %s15, 3
      %s507 = scalar_select %p506, %s15, 3
      %s508 = smul.addr %s507, 8
      %s509 = scalar_lea.vmem %s4, %s508
      // Predicated region
      $region37: #{multimodal_supervised_loss.1} parent=35 // pred_check
        %p510 = pneg %p137
      $region38: #{multimodal_supervised_loss.1} parent=35 // pred_check_branch
        %512 = sbr.rel (%p510) target = $region40
      $region39: #{multimodal_supervised_loss.1} parent=35 // pred_region
        _
      $region40: #{multimodal_supervised_loss.1} parent=35 // pred_fallthru
        _
    $region36: #{multimodal_supervised_loss.1} parent=5 // pred_fallthru
      _
    %p513 = scmp.le.s32.totalorder 2, %s10
    // Predicated region
    $region41: #{multimodal_supervised_loss.1} parent=5 // pred_check
      %p514 = pneg %p513
    $region42: #{multimodal_supervised_loss.1} parent=5 // pred_check_branch
      %516 = sbr.rel (%p514) target = $region44
    $region43: #{multimodal_supervised_loss.1} parent=5 // pred_region
      %s517 = ssub.s32 %s10, 2
      // Predicated region
      $region45: #{multimodal_supervised_loss.1} parent=43 // pred_check
        %p518 = pneg %p143
      $region46: #{multimodal_supervised_loss.1} parent=43 // pred_check_branch
        %520 = sbr.rel (%p518) target = $region48
      $region47: #{multimodal_supervised_loss.1} parent=43 // pred_region
        %p521 = scmp.lt.s32.totalorder %s16, 3
        %s522 = scalar_select %p521, %s16, 3
        %s523 = smul.addr %s522, 8
        %s524 = scalar_lea.vmem %s4, %s523
      $region48: #{multimodal_supervised_loss.1} parent=43 // pred_fallthru
        _
    $region44: #{multimodal_supervised_loss.1} parent=5 // pred_fallthru
      _
  $region6: #{multimodal_supervised_loss.1} parent=0 // loop_footer
    %s14 = sadd.s32 1, %s10
  $region7: #{multimodal_supervised_loss.1} parent=0 // loop_footer_branch
    %9 = sbr.rel target = $region3
  $region8: #{multimodal_supervised_loss.1} parent=0 // loop_exit
    _

</llo_original>
